<compile_context>
chip_gen: v7x
topology: tpu7x:2x2x1
jax: 0.10.0
libtpu: 0.0.40
codegen_flags: <defaults>
</compile_context>

<pallas_src>
import functools
import math
from typing import NamedTuple

import jax
import jax.numpy as jnp
import numpy as np
from jax.experimental import pallas as pl
from jax.experimental.pallas import tpu as pltpu


class Hyperparams(NamedTuple):
    loss_pos_weight: float = 1.0
    loss_dir_weight: float = 1.0
    loss_curv_weight: float = 1.0
    loss_kl_weight: float = 1.0


# ----------------------------------------------------------------------------
# Small host-side helpers.
# ----------------------------------------------------------------------------
def _round_up(x: int, m: int) -> int:
    return ((x + m - 1) // m) * m


def _cdiv(a: int, b: int) -> int:
    return -(-a // b)


def _pick_fold(batch: int, feat: int) -> int:
    """Strands folded per row so the lane width g*feat is a multiple of 128."""
    if feat % 128 == 0:
        return 1
    g = 128 // math.gcd(feat, 128)
    if batch % g == 0 and batch >= g:
        return g
    return 1


def _pick_batch_tile(n_rows: int, row_bytes: int, *,
                     max_tile_bytes: int = 8 << 20,
                     max_tile_rows: int = 4096) -> int:
    """Batch-tile rows: multiple of 8, under a lane-padded VMEM budget."""
    if n_rows <= 8:
        return max(n_rows, 1)          # single full-extent block
    tb = (max_tile_bytes // max(row_bytes, 1)) // 8 * 8
    tb = max(8, min(tb, max_tile_rows, (n_rows // 8) * 8))
    # Keep >= 4 grid steps when there is enough work so both v7x TensorCores
    # stream data (grid axis is "parallel"); harmless on v5e/v6e.
    if n_rows >= 32:
        tb = min(tb, max(8, _round_up(_cdiv(n_rows, 4), 8)))
    return tb


def _seam_masks(width: int, seg: int):
    """(2, W) f32 masks: row 0 = valid first-diff lanes, row 1 = second-diff."""
    lane = np.arange(width) % seg
    m = np.stack([(lane < seg - 3), (lane < seg - 6)]).astype(np.float32)
    return jnp.asarray(m)


# ----------------------------------------------------------------------------
# One-time probe: pin down pltpu.roll direction (and availability).
# ----------------------------------------------------------------------------
@functools.lru_cache(maxsize=1)
def _roll_shift_mode():
    """Returns 'jnp' (out[l]=x[l-shift]), 'flipped' (out[l]=x[l+shift]), or None."""
    def probe(x_ref, o_ref):
        o_ref[...] = pltpu.roll(x_ref[...], 3, 1)
    try:
        x = jax.lax.broadcasted_iota(jnp.float32, (8, 128), 1)
        y = pl.pallas_call(
            probe, out_shape=jax.ShapeDtypeStruct((8, 128), jnp.float32))(x)
        v = int(jax.device_get(y[0, 0]))
    except Exception:
        return None
    if v == 125:
        return "jnp"
    if v == 3:
        return "flipped"
    return None


# ----------------------------------------------------------------------------
# Kernel.
# ----------------------------------------------------------------------------
def _partial_slab(s_pos, s_dir, s_curv, s_kl):
    """Pack four scalar partial sums into rows 0..3 of an (8, 128) f32 slab."""
    row = jax.lax.broadcasted_iota(jnp.int32, (8, 128), 0)
    slab = (jnp.where(row == 0, s_pos, 0.0)
            + jnp.where(row == 1, s_dir, 0.0)
            + jnp.where(row == 2, s_curv, 0.0)
            + jnp.where(row == 3, s_kl, 0.0))
    return slab.astype(jnp.float32)


def _make_kernel(n_valid_rows: int, tb: int, shift: int, *,
                 use_roll: bool, has_kl: bool, mask_rows: bool):
    def kernel(*refs):
        it = iter(refs)
        gt_ref = next(it)
        pred_ref = next(it)
        mask_ref = next(it) if use_roll else None
        zm_ref = next(it) if has_kl else None
        zl_ref = next(it) if has_kl else None
        out_ref = next(it)

        d = gt_ref[...].astype(jnp.float32) - pred_ref[...].astype(jnp.float32)
        if mask_rows:
            # Tail rows of the last (partial) block are undefined -> zero them.
            row0 = pl.program_id(0) * tb
            rows = jax.lax.broadcasted_iota(jnp.int32, d.shape, 0) + row0
            d = jnp.where(rows < n_valid_rows, d, 0.0)
        s_pos = jnp.sum(jnp.abs(d))

        if use_roll:
            # dd[l] = d[l+3] - d[l]; seam/wrap lanes are zeroed by the masks.
            dir_m = mask_ref[0:1, :]
            curv_m = mask_ref[1:2, :]
            dd = pltpu.roll(d, shift, 1) - d
            s_dir = jnp.sum(jnp.abs(dd) * dir_m)
            dc = pltpu.roll(dd, shift, 1) - dd
            s_curv = jnp.sum(jnp.abs(dc) * curv_m)
        else:
            dd = d[:, 3:] - d[:, :-3]      # first difference along L
            s_dir = jnp.sum(jnp.abs(dd))
            dc = dd[:, 3:] - dd[:, :-3]    # second difference along L
            s_curv = jnp.sum(jnp.abs(dc))

        if has_kl:
            mu = zm_ref[...].astype(jnp.float32)
            ls = zl_ref[...].astype(jnp.float32)
            kl = 0.5 * (mu * mu + jnp.exp(2.0 * ls) - 2.0 * ls - 1.0)
            if mask_rows:
                row0 = pl.program_id(0) * tb
                rows_kl = jax.lax.broadcasted_iota(jnp.int32, kl.shape, 0) + row0
                kl = jnp.where(rows_kl < n_valid_rows, kl, 0.0)
            s_kl = jnp.sum(kl)
        else:
            s_kl = jnp.float32(0.0)

        out_ref[0] = _partial_slab(s_pos, s_dir, s_curv, s_kl)

    return kernel


def _run_loss_sums(gt2, pred2, zm2, zl2, *, seg, use_roll, shift):
    """Returns [sum|d_pos|, sum|d_dir|, sum|d_curv|, sum_kl] (un-normalized)."""
    n_rows, width = gt2.shape
    has_kl = zm2 is not None
    g_d = zm2.shape[1] if has_kl else 0

    # VMEM row footprint with lane padding to 128 (4 B/elem, conservative).
    row_bytes = 2 * _round_up(width, 128) * 4
    if has_kl:
        row_bytes += 2 * _round_up(g_d, 128) * 4
    tb = _pick_batch_tile(n_rows, row_bytes)
    grid = _cdiv(n_rows, tb)
    mask_rows = (n_rows % tb) != 0

    kernel = _make_kernel(n_rows, tb, shift, use_roll=use_roll,
                          has_kl=has_kl, mask_rows=mask_rows)

    in_specs = [pl.BlockSpec((tb, width), lambda i: (i, 0)),
                pl.BlockSpec((tb, width), lambda i: (i, 0))]
    args = [gt2, pred2]
    if use_roll:
        in_specs.append(pl.BlockSpec((2, width), lambda i: (0, 0)))
        args.append(_seam_masks(width, seg))
    if has_kl:
        in_specs += [pl.BlockSpec((tb, g_d), lambda i: (i, 0)),
                     pl.BlockSpec((tb, g_d), lambda i: (i, 0))]
        args += [zm2, zl2]

    tile_bytes = tb * row_bytes + (2 * _round_up(width, 128) * 4 if use_roll else 0)
    vmem_limit = int(min(48 << 20, max(16 << 20, 2 * tile_bytes + (4 << 20))))

    flops = 8 * n_rows * width + (7 * n_rows * g_d if has_kl else 0)
    transcendentals = n_rows * g_d if has_kl else 0
    bytes_accessed = (sum(int(a.size) * a.dtype.itemsize for a in args)
                      + grid * 8 * 128 * 4)

    partials = pl.pallas_call(
        kernel,
        out_shape=jax.ShapeDtypeStruct((grid, 8, 128), jnp.float32),
        grid=(grid,),
        in_specs=in_specs,
        out_specs=pl.BlockSpec((1, 8, 128), lambda i: (i, 0, 0)),
        compiler_params=pltpu.CompilerParams(
            dimension_semantics=("parallel",),
            vmem_limit_bytes=vmem_limit),
        cost_estimate=pl.CostEstimate(flops=int(flops),
                                      transcendentals=int(transcendentals),
                                      bytes_accessed=int(bytes_accessed)),
    )(*args)

    # Per-tile partials live in rows 0..3, lane 0 of each slab.
    return jnp.sum(partials[:, :4, 0], axis=0)   # (4,)


# ----------------------------------------------------------------------------
# Public wrapper (forward pass of StrandVAELoss).
# ----------------------------------------------------------------------------
def strand_vae_loss(phase, gt_dict, pred_dict, latent_dict, hyperparams,
                    eps: float = 1e-8):
    del phase, eps  # eps is stored but unused in the reference forward pass
    gt = gt_dict["strand_positions"]
    pred = pred_dict["strand_positions"]
    B, L, C = gt.shape
    F = L * C

    has_kl = "z_logstd" in latent_dict
    z_mean = latent_dict["z_mean"] if has_kl else None
    z_logstd = latent_dict["z_logstd"] if has_kl else None

    roll_mode = _roll_shift_mode()
    g = _pick_fold(B, F) if roll_mode is not None else 1
    n_rows = B // g
    width = g * F
    use_roll = (roll_mode is not None) and (width % 128 == 0)
    shift = 0
    if use_roll:
        shift = (width - 3) if roll_mode == "jnp" else 3

    gt2 = jnp.reshape(gt, (n_rows, width))        # free, contiguous reshapes
    pred2 = jnp.reshape(pred, (n_rows, width))
    zm2 = zl2 = None
    if has_kl:
        zm2 = jnp.reshape(z_mean, (n_rows, g * z_mean.shape[1]))
        zl2 = jnp.reshape(z_logstd, (n_rows, g * z_logstd.shape[1]))

    sums = _run_loss_sums(gt2, pred2, zm2, zl2,
                          seg=F, use_roll=use_roll, shift=shift)

    loss_pos = sums[0] / float(B * L * C)
    loss_dir = sums[1] / float(B * (L - 1) * C)
    loss_curv = sums[2] / float(B * (L - 2) * C)
    if has_kl:
        loss_kl = sums[3] / float(z_mean.shape[0] * z_mean.shape[1])
    else:
        loss_kl = jnp.float32(0.0)

    loss = (loss_pos * hyperparams.loss_pos_weight
            + loss_dir * hyperparams.loss_dir_weight
            + loss_curv * hyperparams.loss_curv_weight
            + loss_kl * hyperparams.loss_kl_weight)

    return {
        "loss": loss,
        "loss_pos": loss_pos,
        "loss_dir": loss_dir,
        "loss_curv": loss_curv,
        "loss_kl": loss_kl,
    }


# ----------------------------------------------------------------------------
# Pure-jnp reference + self-test.
# ----------------------------------------------------------------------------
def _reference_loss(gt, pred, z_mean, z_logstd, hp):
    loss_pos = jnp.mean(jnp.abs(gt - pred))
    gd = gt[:, 1:] - gt[:, :-1]
    pd = pred[:, 1:] - pred[:, :-1]
    loss_dir = jnp.mean(jnp.abs(gd - pd))
    gc = gd[:, 1:] - gd[:, :-1]
    pc = pd[:, 1:] - pd[:, :-1]
    loss_curv = jnp.mean(jnp.abs(gc - pc))
    if z_mean is not None:
        loss_kl = jnp.mean(0.5 * (z_mean**2 + jnp.exp(2 * z_logstd)
                                  - 2 * z_logstd - 1.0))
    else:
        loss_kl = jnp.float32(0.0)
    loss = (loss_pos * hp.loss_pos_weight + loss_dir * hp.loss_dir_weight
            + loss_curv * hp.loss_curv_weight + loss_kl * hp.loss_kl_weight)
    return dict(loss=loss, loss_pos=loss_pos, loss_dir=loss_dir,
                loss_curv=loss_curv, loss_kl=loss_kl)


def _check_case(name, key, B, L, D, with_kl, hp):
    k1, k2, k3, k4 = jax.random.split(key, 4)
    gt = jax.random.normal(k1, (B, L, 3), jnp.float32)
    pred = gt + 0.1 * jax.random.normal(k2, (B, L, 3), jnp.float32)
    latent = {}
    z_mean = z_logstd = None
    if with_kl:
        z_mean = 0.5 * jax.random.normal(k3, (B, D), jnp.float32)
        z_logstd = 0.1 * jax.random.normal(k4, (B, D), jnp.float32)
        latent = {"z_mean": z_mean, "z_logstd": z_logstd}

    out = strand_vae_loss("train", {"strand_positions": gt},
                          {"strand_positions": pred}, latent, hp)
    out = jax.block_until_ready(out)
    ref = _reference_loss(gt, pred, z_mean, z_logstd, hp)
    for k in ("loss", "loss_pos", "loss_dir", "loss_curv", "loss_kl"):
        np.testing.assert_allclose(np.asarray(out[k]), np.asarray(ref[k]),
                                   rtol=1e-5, atol=1e-6,
                                   err_msg=f"{name}:{k}")


if __name__ == "__main__":
    hp = Hyperparams(loss_pos_weight=1.0, loss_dir_weight=10.0,
                     loss_curv_weight=100.0, loss_kl_weight=1e-3)
    key = jax.random.PRNGKey(0)
    keys = jax.random.split(key, 4)

    # Folded (g=8, lane width 384), single block, with KL.
    _check_case("fold_kl", keys[0], B=16, L=16, D=32, with_kl=True, hp=hp)
    # Same shapes without KL (separate kernel variant, no latent streams).
    _check_case("fold_nokl", keys[1], B=16, L=16, D=32, with_kl=False, hp=hp)
    # Folded with a partial tail block (10 rows, tb=8, grid=2) -> row masking.
    _check_case("fold_tail", keys[2], B=80, L=16, D=32, with_kl=True, hp=hp)
    # Batch not divisible by the fold factor -> slice fallback + tail masking.
    _check_case("nofold_tail", keys[3], B=13, L=16, D=32, with_kl=True, hp=hp)

    print("KERNEL_OK")
</pallas_src>

<mosaic_0001>
module attributes {stable_mosaic.version = 11 : i64} {
  func.func @probe(%arg0: memref<8x128xf32, #tpu.memory_space<vmem>>, %arg1: memref<8x128xf32, #tpu.memory_space<vmem>>) attributes {dimension_semantics = [], scalar_prefetch = 0 : i64, scratch_operands = 0 : i64, tpu.core_type = #tpu.core_type<tc>} {
    %c0 = arith.constant 0 : index
    %c0_0 = arith.constant 0 : index
    %0 = vector.load %arg0[%c0, %c0_0] : memref<8x128xf32, #tpu.memory_space<vmem>>, vector<8x128xf32>
    %c3_i32 = arith.constant 3 : i32
    %1 = tpu.dynamic_rotate %0 by %c3_i32 dim 1 : vector<8x128xf32>, i32 -> vector<8x128xf32>
    %c0_1 = arith.constant 0 : index
    %c0_2 = arith.constant 0 : index
    %2 = vector.load %arg1[%c0_1, %c0_2] : memref<8x128xf32, #tpu.memory_space<vmem>>, vector<8x128xf32>
    tpu.vector_store %arg1[%c0_1, %c0_2], %1 {strides = array<i32>} : memref<8x128xf32, #tpu.memory_space<vmem>>, vector<8x128xf32>,
    return
  }
}

module attributes {stable_mosaic.version = 11 : i64} {
  func.func @kernel(%arg0: i32, %arg1: memref<16x48xf32, #tpu.memory_space<vmem>>, %arg2: memref<16x48xf32, #tpu.memory_space<vmem>>, %arg3: memref<16x32xf32, #tpu.memory_space<vmem>>, %arg4: memref<16x32xf32, #tpu.memory_space<vmem>>, %arg5: memref<1x8x128xf32, #tpu.memory_space<vmem>>) attributes {dimension_semantics = [#tpu.dimension_semantics<parallel>], iteration_bounds = array<i64: 1>, scalar_prefetch = 0 : i64, scratch_operands = 0 : i64, tpu.core_type = #tpu.core_type<tc>, window_params = [{transform_indices = @transform_0, window_bounds = array<i64: 16, 48>}, {transform_indices = @transform_1, window_bounds = array<i64: 16, 48>}, {transform_indices = @transform_2, window_bounds = array<i64: 16, 32>}, {transform_indices = @transform_3, window_bounds = array<i64: 16, 32>}, {transform_indices = @transform_4, window_bounds = array<i64: 1, 8, 128>}]} {
    %c0 = arith.constant 0 : index
    %c0_0 = arith.constant 0 : index
    %0 = vector.load %arg1[%c0, %c0_0] : memref<16x48xf32, #tpu.memory_space<vmem>>, vector<16x48xf32>
    %c0_1 = arith.constant 0 : index
    %c0_2 = arith.constant 0 : index
    %1 = vector.load %arg2[%c0_1, %c0_2] : memref<16x48xf32, #tpu.memory_space<vmem>>, vector<16x48xf32>
    %2 = arith.subf %0, %1 : vector<16x48xf32>
    %3 = math.absf %2 : vector<16x48xf32>
    %4 = vector.shape_cast %3 : vector<16x48xf32> to vector<1x16x48xf32>
    %cst = arith.constant dense<0.000000e+00> : vector<1xf32>
    %5 = vector.multi_reduction <add>, %4, %cst [1, 2] : vector<1x16x48xf32> to vector<1xf32>
    %6 = vector.shape_cast %5 : vector<1xf32> to vector<1x1x1xf32>
    %7 = vector.extract %6[0, 0, 0] : f32 from vector<1x1x1xf32>
    %8 = vector.extract_strided_slice %2 {offsets = [0, 3], sizes = [16, 45], strides = [1, 1]} : vector<16x48xf32> to vector<16x45xf32>
    %9 = vector.extract_strided_slice %2 {offsets = [0, 0], sizes = [16, 45], strides = [1, 1]} : vector<16x48xf32> to vector<16x45xf32>
    %10 = arith.subf %8, %9 : vector<16x45xf32>
    %11 = math.absf %10 : vector<16x45xf32>
    %12 = vector.shape_cast %11 : vector<16x45xf32> to vector<1x16x45xf32>
    %cst_3 = arith.constant dense<0.000000e+00> : vector<1xf32>
    %13 = vector.multi_reduction <add>, %12, %cst_3 [1, 2] : vector<1x16x45xf32> to vector<1xf32>
    %14 = vector.shape_cast %13 : vector<1xf32> to vector<1x1x1xf32>
    %15 = vector.extract %14[0, 0, 0] : f32 from vector<1x1x1xf32>
    %16 = vector.extract_strided_slice %10 {offsets = [0, 3], sizes = [16, 42], strides = [1, 1]} : vector<16x45xf32> to vector<16x42xf32>
    %17 = vector.extract_strided_slice %10 {offsets = [0, 0], sizes = [16, 42], strides = [1, 1]} : vector<16x45xf32> to vector<16x42xf32>
    %18 = arith.subf %16, %17 : vector<16x42xf32>
    %19 = math.absf %18 : vector<16x42xf32>
    %20 = vector.shape_cast %19 : vector<16x42xf32> to vector<1x16x42xf32>
    %cst_4 = arith.constant dense<0.000000e+00> : vector<1xf32>
    %21 = vector.multi_reduction <add>, %20, %cst_4 [1, 2] : vector<1x16x42xf32> to vector<1xf32>
    %22 = vector.shape_cast %21 : vector<1xf32> to vector<1x1x1xf32>
    %23 = vector.extract %22[0, 0, 0] : f32 from vector<1x1x1xf32>
    %c0_5 = arith.constant 0 : index
    %c0_6 = arith.constant 0 : index
    %24 = vector.load %arg3[%c0_5, %c0_6] : memref<16x32xf32, #tpu.memory_space<vmem>>, vector<16x32xf32>
    %c0_7 = arith.constant 0 : index
    %c0_8 = arith.constant 0 : index
    %25 = vector.load %arg4[%c0_7, %c0_8] : memref<16x32xf32, #tpu.memory_space<vmem>>, vector<16x32xf32>
    %26 = arith.mulf %24, %24 : vector<16x32xf32>
    %cst_9 = arith.constant 2.000000e+00 : f32
    %27 = vector.broadcast %cst_9 : f32 to vector<16x32xf32>
    %28 = arith.mulf %27, %25 : vector<16x32xf32>
    %29 = math.exp %28 : vector<16x32xf32>
    %30 = arith.addf %26, %29 : vector<16x32xf32>
    %cst_10 = arith.constant 2.000000e+00 : f32
    %31 = vector.broadcast %cst_10 : f32 to vector<16x32xf32>
    %32 = arith.mulf %31, %25 : vector<16x32xf32>
    %33 = arith.subf %30, %32 : vector<16x32xf32>
    %cst_11 = arith.constant 1.000000e+00 : f32
    %34 = vector.broadcast %cst_11 : f32 to vector<16x32xf32>
    %35 = arith.subf %33, %34 : vector<16x32xf32>
    %cst_12 = arith.constant 5.000000e-01 : f32
    %36 = vector.broadcast %cst_12 : f32 to vector<16x32xf32>
    %37 = arith.mulf %36, %35 : vector<16x32xf32>
    %38 = vector.shape_cast %37 : vector<16x32xf32> to vector<1x16x32xf32>
    %cst_13 = arith.constant dense<0.000000e+00> : vector<1xf32>
    %39 = vector.multi_reduction <add>, %38, %cst_13 [1, 2] : vector<1x16x32xf32> to vector<1xf32>
    %40 = vector.shape_cast %39 : vector<1xf32> to vector<1x1x1xf32>
    %41 = vector.extract %40[0, 0, 0] : f32 from vector<1x1x1xf32>
    %42 = tpu.iota {dimensions = array<i32: 0>} : vector<8x128xi32>
    %c0_i32 = arith.constant 0 : i32
    %43 = vector.broadcast %c0_i32 : i32 to vector<8x128xi32>
    %44 = arith.cmpi eq, %42, %43 : vector<8x128xi32>
    %cst_14 = arith.constant 0.000000e+00 : f32
    %45 = vector.broadcast %7 : f32 to vector<8x128xf32>
    %46 = vector.broadcast %cst_14 : f32 to vector<8x128xf32>
    %47 = arith.select %44, %45, %46 : vector<8x128xi1>, vector<8x128xf32>
    %c1_i32 = arith.constant 1 : i32
    %48 = vector.broadcast %c1_i32 : i32 to vector<8x128xi32>
    %49 = arith.cmpi eq, %42, %48 : vector<8x128xi32>
    %cst_15 = arith.constant 0.000000e+00 : f32
    %50 = vector.broadcast %15 : f32 to vector<8x128xf32>
    %51 = vector.broadcast %cst_15 : f32 to vector<8x128xf32>
    %52 = arith.select %49, %50, %51 : vector<8x128xi1>, vector<8x128xf32>
    %53 = arith.addf %47, %52 : vector<8x128xf32>
    %c2_i32 = arith.constant 2 : i32
    %54 = vector.broadcast %c2_i32 : i32 to vector<8x128xi32>
    %55 = arith.cmpi eq, %42, %54 : vector<8x128xi32>
    %cst_16 = arith.constant 0.000000e+00 : f32
    %56 = vector.broadcast %23 : f32 to vector<8x128xf32>
    %57 = vector.broadcast %cst_16 : f32 to vector<8x128xf32>
    %58 = arith.select %55, %56, %57 : vector<8x128xi1>, vector<8x128xf32>
    %59 = arith.addf %53, %58 : vector<8x128xf32>
    %c3_i32 = arith.constant 3 : i32
    %60 = vector.broadcast %c3_i32 : i32 to vector<8x128xi32>
    %61 = arith.cmpi eq, %42, %60 : vector<8x128xi32>
    %cst_17 = arith.constant 0.000000e+00 : f32
    %62 = vector.broadcast %41 : f32 to vector<8x128xf32>
    %63 = vector.broadcast %cst_17 : f32 to vector<8x128xf32>
    %64 = arith.select %61, %62, %63 : vector<8x128xi1>, vector<8x128xf32>
    %65 = arith.addf %59, %64 : vector<8x128xf32>
    %c0_18 = arith.constant 0 : index
    %c0_19 = arith.constant 0 : index
    %c0_20 = arith.constant 0 : index
    %66 = vector.load %arg5[%c0_18, %c0_19, %c0_20] : memref<1x8x128xf32, #tpu.memory_space<vmem>>, vector<1x8x128xf32>
    %67 = vector.shape_cast %66 : vector<1x8x128xf32> to vector<8x128xf32>
    %68 = vector.shape_cast %65 : vector<8x128xf32> to vector<1x8x128xf32>
    tpu.vector_store %arg5[%c0_18, %c0_19, %c0_20], %68 {strides = array<i32>} : memref<1x8x128xf32, #tpu.memory_space<vmem>>, vector<1x8x128xf32>,
    return
  }
  func.func @transform_0(%arg0: i32) -> (i32, i32) {
    %c0_i32 = arith.constant 0 : i32
    %c0_i32_0 = arith.constant 0 : i32
    return %arg0, %c0_i32 : i32, i32
  }
  func.func @transform_1(%arg0: i32) -> (i32, i32) {
    %c0_i32 = arith.constant 0 : i32
    %c0_i32_0 = arith.constant 0 : i32
    return %arg0, %c0_i32 : i32, i32
  }
  func.func @transform_2(%arg0: i32) -> (i32, i32) {
    %c0_i32 = arith.constant 0 : i32
    %c0_i32_0 = arith.constant 0 : i32
    return %arg0, %c0_i32 : i32, i32
  }
  func.func @transform_3(%arg0: i32) -> (i32, i32) {
    %c0_i32 = arith.constant 0 : i32
    %c0_i32_0 = arith.constant 0 : i32
    return %arg0, %c0_i32 : i32, i32
  }
  func.func @transform_4(%arg0: i32) -> (i32, i32, i32) {
    %c0_i32 = arith.constant 0 : i32
    %c0_i32_0 = arith.constant 0 : i32
    %c0_i32_1 = arith.constant 0 : i32
    return %arg0, %c0_i32, %c0_i32_0 : i32, i32, i32
  }
}

</mosaic_0001>

<llo_original>
// kernel: tpu_custom_call.1
$region0: #{tpu_custom_call.1}
  #allocation0 [shape = 'u32[]', space=smem, size = 0x4, offset = 0x4, fixed_abs, tag = 'smem constant byte address 0x4 - core index']
  #allocation1 [shape = 'u32[144,128]{1,0:T(1,128)}', space=vmem, size = 0x12000, scoped, tag = 'internal scratch']
  %s0 = inlined_call_operand.hbm [shape: f32[8,128], index: 0, kind: input, shape index: {}]
  %s1 = inlined_call_operand.hbm [shape: f32[8,128], index: 1, kind: output, shape index: {}]
  %s2 = sld [smem:[#allocation0]]
  $region18: #{tpu_custom_call.1} parent=0
    _
  %s4 = ssub.s32 1, %s2
  %s5 = scalar_select 0, %s4, %s2
  $region1: #{tpu_custom_call.1} parent=0
    #allocation2 [shape = 'u8[4096]{0}', space=vmem, size = 0x1000, scoped, tag = 'input window, operand 0, single buffered']
    #allocation3 [shape = 's32[1]{0}', space=sflag, size = 0x4, scoped, tag = 'scoped memory for tpu_custom_call.1']
    #allocation4 [shape = 's32[1]{0}', space=sflag, size = 0x4, scoped, tag = 'scoped memory for tpu_custom_call.1']
    #allocation5 [shape = 'u8[4096]{0}', space=vmem, size = 0x1000, scoped, tag = 'output window, operand 0, single buffered']
    %6 = vsyncpa [#allocation3], 0
    %7 = vsyncpa [#allocation4], 0
    // Predicated region
    $region2: #{tpu_custom_call.1} parent=1 // pred_check
      _
    $region3: #{tpu_custom_call.1} parent=1 // pred_check_branch
      %9 = sbr.rel (0) target = $region5
    $region4: #{tpu_custom_call.1} parent=1 // pred_region
      %s11 = ssub.s32 128, 128
      %12 = vsyncadd [#allocation3], %s11
      %s14 = sshll.u32 [#allocation2], 4
      %s15 = int_to_ptr.vmem [resolvable:$true] %s14
      %17 = dma.hbm_to_vmem [thread:$0]  %s0, 128, %s15, [#allocation3]
    $region5: #{tpu_custom_call.1} parent=1 // pred_fallthru
      _
    // Predicated region
    $region6: #{tpu_custom_call.1} parent=1 // pred_check
      _
    $region7: #{tpu_custom_call.1} parent=1 // pred_check_branch
      %19 = sbr.rel (0) target = $region9
    $region8: #{tpu_custom_call.1} parent=1 // pred_region
      %20 = dma.done [#allocation3], 128
    $region9: #{tpu_custom_call.1} parent=1 // pred_fallthru
      _
    %v21 = vld [vmem:[#allocation2] sm:$0xff]
    %22 = vrot.lane.b32.xlu0 %v21, 3
    %v23 = vpop.permute.xlu0 %22
    %24 = vst [vmem:[#allocation5] sm:$0xff] %v23
    // Predicated region
    $region10: #{tpu_custom_call.1} parent=1 // pred_check
      _
    $region11: #{tpu_custom_call.1} parent=1 // pred_check_branch
      %26 = sbr.rel (0) target = $region13
    $region12: #{tpu_custom_call.1} parent=1 // pred_region
      %s28 = ssub.s32 128, 128
      %29 = vsyncadd [#allocation4], %s28
      %s31 = sshll.u32 [#allocation5], 4
      %s32 = int_to_ptr.vmem [resolvable:$true] %s31
      %34 = dma.vmem_to_hbm [thread:$0]  %s32, 128, %s1, [#allocation4]
    $region13: #{tpu_custom_call.1} parent=1 // pred_fallthru
      _
    // Predicated region
    $region14: #{tpu_custom_call.1} parent=1 // pred_check
      _
    $region15: #{tpu_custom_call.1} parent=1 // pred_check_branch
      %36 = sbr.rel (0) target = $region17
    $region16: #{tpu_custom_call.1} parent=1 // pred_region
      %37 = dma.done [#allocation4], 128
    $region17: #{tpu_custom_call.1} parent=1 // pred_fallthru
      _
    %38 = vsyncpa [#allocation3], 1
    %39 = vsyncpa [#allocation4], 1

// kernel: tpu_custom_call.1
$region0: #{tpu_custom_call.1}
  #allocation0 [shape = 'u32[]', space=smem, size = 0x4, offset = 0x4, fixed_abs, tag = 'smem constant byte address 0x4 - core index']
  #allocation1 [shape = 'u32[144,128]{1,0:T(1,128)}', space=vmem, size = 0x12000, scoped, tag = 'internal scratch']
  %s0 = inlined_call_operand.hbm [shape: f32[16,48], index: 0, kind: input, shape index: {}]
  %s1 = inlined_call_operand.hbm [shape: f32[16,48], index: 1, kind: input, shape index: {}]
  %s2 = inlined_call_operand.hbm [shape: f32[16,32], index: 2, kind: input, shape index: {}]
  %s3 = inlined_call_operand.hbm [shape: f32[16,32], index: 3, kind: input, shape index: {}]
  %s4 = inlined_call_operand.hbm [shape: f32[1,8,128], index: 4, kind: output, shape index: {}]
  %s5 = sld [smem:[#allocation0]]
  $region42: #{tpu_custom_call.1} parent=0
    _
  %s7 = ssub.s32 1, %s5
  %s8 = scalar_select 0, %s7, %s5
  $region1: #{tpu_custom_call.1} parent=0
    #allocation2 [shape = 'u8[8192]{0}', space=vmem, size = 0x2000, scoped, tag = 'input window, operand 0, single buffered']
    #allocation3 [shape = 's32[1]{0}', space=sflag, size = 0x4, scoped, tag = 'scoped memory for tpu_custom_call.1']
    #allocation4 [shape = 's32[1]{0}', space=sflag, size = 0x4, scoped, tag = 'scoped memory for tpu_custom_call.1']
    #allocation5 [shape = 'u8[8192]{0}', space=vmem, size = 0x2000, scoped, tag = 'input window, operand 1, single buffered']
    #allocation6 [shape = 's32[1]{0}', space=sflag, size = 0x4, scoped, tag = 'scoped memory for tpu_custom_call.1']
    #allocation7 [shape = 'u8[8192]{0}', space=vmem, size = 0x2000, scoped, tag = 'input window, operand 2, single buffered']
    #allocation8 [shape = 'u8[8192]{0}', space=vmem, size = 0x2000, scoped, tag = 'input window, operand 3, single buffered']
    #allocation9 [shape = 's32[1]{0}', space=sflag, size = 0x4, scoped, tag = 'scoped memory for tpu_custom_call.1']
    #allocation10 [shape = 'u8[4096]{0}', space=vmem, size = 0x1000, scoped, tag = 'output window, operand 0, single buffered']
    %9 = vsyncpa [#allocation3], 0
    %10 = vsyncpa [#allocation6], 0
    %11 = vsyncpa [#allocation9], 0
    %12 = vsyncpa [#allocation4], 0
    // Predicated region
    $region2: #{tpu_custom_call.1} parent=1 // pred_check
      _
    $region3: #{tpu_custom_call.1} parent=1 // pred_check_branch
      %14 = sbr.rel (0) target = $region5
    $region4: #{tpu_custom_call.1} parent=1 // pred_region
      %s16 = ssub.s32 256, 256
      %17 = vsyncadd [#allocation3], %s16
      %s18 = sshll.u32 [#allocation2], 4
      %s19 = int_to_ptr.vmem [resolvable:$true] %s18
      %24 = dma.hbm_to_vmem [thread:$0]  %s0, 256, %s19, [#allocation3], 128, 128, 8
    $region5: #{tpu_custom_call.1} parent=1 // pred_fallthru
      _
    // Predicated region
    $region6: #{tpu_custom_call.1} parent=1 // pred_check
      _
    $region7: #{tpu_custom_call.1} parent=1 // pred_check_branch
      %26 = sbr.rel (0) target = $region9
    $region8: #{tpu_custom_call.1} parent=1 // pred_region
      %s28 = ssub.s32 256, 256
      %29 = vsyncadd [#allocation6], %s28
      %s30 = sshll.u32 [#allocation5], 4
      %s31 = int_to_ptr.vmem [resolvable:$true] %s30
      %36 = dma.hbm_to_vmem [thread:$0]  %s1, 256, %s31, [#allocation6], 128, 128, 8
    $region9: #{tpu_custom_call.1} parent=1 // pred_fallthru
      _
    // Predicated region
    $region10: #{tpu_custom_call.1} parent=1 // pred_check
      _
    $region11: #{tpu_custom_call.1} parent=1 // pred_check_branch
      %38 = sbr.rel (0) target = $region13
    $region12: #{tpu_custom_call.1} parent=1 // pred_region
      %s40 = ssub.s32 256, 256
      %41 = vsyncadd [#allocation6], %s40
      %s42 = sshll.u32 [#allocation7], 4
      %s43 = int_to_ptr.vmem [resolvable:$true] %s42
      %48 = dma.hbm_to_vmem [thread:$0]  %s2, 256, %s43, [#allocation6], 128, 128, 8
    $region13: #{tpu_custom_call.1} parent=1 // pred_fallthru
      _
    // Predicated region
    $region14: #{tpu_custom_call.1} parent=1 // pred_check
      _
    $region15: #{tpu_custom_call.1} parent=1 // pred_check_branch
      %50 = sbr.rel (0) target = $region17
    $region16: #{tpu_custom_call.1} parent=1 // pred_region
      %s52 = ssub.s32 256, 256
      %53 = vsyncadd [#allocation9], %s52
      %s54 = sshll.u32 [#allocation8], 4
      %s55 = int_to_ptr.vmem [resolvable:$true] %s54
      %60 = dma.hbm_to_vmem [thread:$0]  %s3, 256, %s55, [#allocation9], 128, 128, 8
    $region17: #{tpu_custom_call.1} parent=1 // pred_fallthru
      _
    // Predicated region
    $region18: #{tpu_custom_call.1} parent=1 // pred_check
      _
    $region19: #{tpu_custom_call.1} parent=1 // pred_check_branch
      %62 = sbr.rel (0) target = $region21
    $region20: #{tpu_custom_call.1} parent=1 // pred_region
      %63 = dma.done [#allocation3], 256
    $region21: #{tpu_custom_call.1} parent=1 // pred_fallthru
      _
    // Predicated region
    $region22: #{tpu_custom_call.1} parent=1 // pred_check
      _
    $region23: #{tpu_custom_call.1} parent=1 // pred_check_branch
      %65 = sbr.rel (0) target = $region25
    $region24: #{tpu_custom_call.1} parent=1 // pred_region
      %66 = dma.done [#allocation6], 256
    $region25: #{tpu_custom_call.1} parent=1 // pred_fallthru
      _
    // Predicated region
    $region26: #{tpu_custom_call.1} parent=1 // pred_check
      _
    $region27: #{tpu_custom_call.1} parent=1 // pred_check_branch
      %68 = sbr.rel (0) target = $region29
    $region28: #{tpu_custom_call.1} parent=1 // pred_region
      %69 = dma.done [#allocation6], 256
    $region29: #{tpu_custom_call.1} parent=1 // pred_fallthru
      _
    // Predicated region
    $region30: #{tpu_custom_call.1} parent=1 // pred_check
      _
    $region31: #{tpu_custom_call.1} parent=1 // pred_check_branch
      %71 = sbr.rel (0) target = $region33
    $region32: #{tpu_custom_call.1} parent=1 // pred_region
      %72 = dma.done [#allocation9], 256
    $region33: #{tpu_custom_call.1} parent=1 // pred_fallthru
      _
    %v73 = vld [vmem:[#allocation2] sm:$0xff]
    %v74 = vld [vmem:[#allocation2 + $0x8] sm:$0xff]
    %v75 = vld [vmem:[#allocation5] sm:$0xff]
    %v76 = vld [vmem:[#allocation5 + $0x8] sm:$0xff]
    %v77 = vsub.f32 %v73, %v75
    %v78 = vsub.f32 %v74, %v76
    %v79 = vand.u32 2147483647, %v77
    %v80 = vand.u32 2147483647, %v78
    %vm81 = vcmask 392192
    %v82 = vsel %vm81, %v79, 0.0
    %v83 = vsel %vm81, %v80, 0.0
    %v84 = vadd.f32 %v82, %v83
    %85 = vadd.xlane.f32.xlu0 %v84
    %v86 = vpop.xlane.xlu0 %85
    %v87 = vrot.slane %v86, 4
    %v88 = vadd.f32 %v86, %v87
    %v89 = vrot.slane %v88, 2
    %v90 = vadd.f32 %v88, %v89
    %v91 = vrot.slane %v90, 1
    %v92 = vadd.f32 %v90, %v91
    %s93 = vtos %v92
    %96 = vrot.lane.b32.xlu0 %v77, 3
    %v97 = vpop.permute.xlu0 %96
    %98 = vrot.lane.b32.xlu0 %v78, 3
    %v99 = vpop.permute.xlu0 %98
    %v102 = vsub.f32 %v77, %v97
    %v103 = vsub.f32 %v78, %v99
    %v104 = vand.u32 2147483647, %v102
    %v105 = vand.u32 2147483647, %v103
    %108 = vrot.lane.b32.xlu0 %v104, 125
    %v109 = vpop.permute.xlu0 %108
    %110 = vrot.lane.b32.xlu0 %v105, 125
    %v111 = vpop.permute.xlu0 %110
    %vm114 = vcmask 367616
    %v115 = vsel %vm114, %v109, 0.0
    %v116 = vsel %vm114, %v111, 0.0
    %v117 = vadd.f32 %v115, %v116
    %118 = vadd.xlane.f32.xlu0 %v117
    %v119 = vpop.xlane.xlu0 %118
    %v120 = vrot.slane %v119, 4
    %v121 = vadd.f32 %v119, %v120
    %v122 = vrot.slane %v121, 2
    %v123 = vadd.f32 %v121, %v122
    %v124 = vrot.slane %v123, 1
    %v125 = vadd.f32 %v123, %v124
    %s126 = vtos %v125
    %129 = vrot.lane.b32.xlu0 %v102, 3
    %v130 = vpop.permute.xlu0 %129
    %131 = vrot.lane.b32.xlu0 %v103, 3
    %v132 = vpop.permute.xlu0 %131
    %v135 = vsub.f32 %v102, %v130
    %v136 = vsub.f32 %v103, %v132
    %v137 = vand.u32 2147483647, %v135
    %v138 = vand.u32 2147483647, %v136
    %141 = vrot.lane.b32.xlu0 %v137, 122
    %v142 = vpop.permute.xlu0 %141
    %143 = vrot.lane.b32.xlu0 %v138, 122
    %v144 = vpop.permute.xlu0 %143
    %vm147 = vcmask 343040
    %v148 = vsel %vm147, %v142, 0.0
    %v149 = vsel %vm147, %v144, 0.0
    %v150 = vadd.f32 %v148, %v149
    %151 = vadd.xlane.f32.xlu0 %v150
    %v152 = vpop.xlane.xlu0 %151
    %v153 = vrot.slane %v152, 4
    %v154 = vadd.f32 %v152, %v153
    %v155 = vrot.slane %v154, 2
    %v156 = vadd.f32 %v154, %v155
    %v157 = vrot.slane %v156, 1
    %v158 = vadd.f32 %v156, %v157
    %s159 = vtos %v158
    %v160 = vld [vmem:[#allocation7] sm:$0xff]
    %v161 = vld [vmem:[#allocation7 + $0x8] sm:$0xff]
    %v162 = vld [vmem:[#allocation8] sm:$0xff]
    %v163 = vld [vmem:[#allocation8 + $0x8] sm:$0xff]
    %v164 = vmul.f32 %v160, %v160
    %v165 = vmul.f32 %v161, %v161
    %v166 = vmul.f32 %v162, 2.0
    %v167 = vmul.f32 %v163, 2.0
    %v168 = vmul.f32 %v166, 1.442695
    %v169 = vpow.pop %v168
    %v170 = vmul.f32 %v167, 1.442695
    %v171 = vpow.pop %v170
    %v172 = vadd.f32 %v164, %v169
    %v173 = vadd.f32 %v165, %v171
    %v174 = vsub.f32 %v172, %v166
    %v175 = vsub.f32 %v173, %v167
    %v176 = vsub.f32 %v174, 1.0
    %v177 = vsub.f32 %v175, 1.0
    %v178 = vmul.f32 %v176, 0.5
    %v179 = vmul.f32 %v177, 0.5
    %vm180 = vcmask 261120
    %v181 = vsel %vm180, %v178, 0.0
    %v182 = vsel %vm180, %v179, 0.0
    %v183 = vadd.f32 %v181, %v182
    %184 = vadd.xlane.f32.xlu0 %v183
    %v185 = vpop.xlane.xlu0 %184
    %v186 = vrot.slane %v185, 4
    %v187 = vadd.f32 %v185, %v186
    %v188 = vrot.slane %v187, 2
    %v189 = vadd.f32 %v187, %v188
    %v190 = vrot.slane %v189, 1
    %v191 = vadd.f32 %v189, %v190
    %s192 = vtos %v191
    %v193 = vlaneseq
    %v194 = vshrl.u32 %v193, 7
    %vm195 = vcmp.eq.s32.totalorder %v194, 0
    %v196 = vstv %s93
    %v197 = vsel %vm195, %v196, 0.0
    %vm198 = vcmp.eq.s32.totalorder %v194, 1
    %v199 = vstv %s126
    %v200 = vsel %vm198, %v199, 0.0
    %v201 = vadd.f32 %v197, %v200
    %vm202 = vcmp.eq.s32.totalorder %v194, 2
    %v203 = vstv %s159
    %v204 = vsel %vm202, %v203, 0.0
    %v205 = vadd.f32 %v201, %v204
    %vm206 = vcmp.eq.s32.totalorder %v194, 3
    %v207 = vstv %s192
    %v208 = vsel %vm206, %v207, 0.0
    %v209 = vadd.f32 %v205, %v208
    %210 = vst [vmem:[#allocation10] sm:$0xff] %v209
    // Predicated region
    $region34: #{tpu_custom_call.1} parent=1 // pred_check
      _
    $region35: #{tpu_custom_call.1} parent=1 // pred_check_branch
      %212 = sbr.rel (0) target = $region37
    $region36: #{tpu_custom_call.1} parent=1 // pred_region
      %s214 = ssub.s32 128, 128
      %215 = vsyncadd [#allocation4], %s214
      %s217 = sshll.u32 [#allocation10], 4
      %s218 = int_to_ptr.vmem [resolvable:$true] %s217
      %220 = dma.vmem_to_hbm [thread:$0]  %s218, 128, %s4, [#allocation4]
    $region37: #{tpu_custom_call.1} parent=1 // pred_fallthru
      _
    // Predicated region
    $region38: #{tpu_custom_call.1} parent=1 // pred_check
      _
    $region39: #{tpu_custom_call.1} parent=1 // pred_check_branch
      %222 = sbr.rel (0) target = $region41
    $region40: #{tpu_custom_call.1} parent=1 // pred_region
      %223 = dma.done [#allocation4], 128
    $region41: #{tpu_custom_call.1} parent=1 // pred_fallthru
      _
    %224 = vsyncpa [#allocation3], 1
    %225 = vsyncpa [#allocation6], 1
    %226 = vsyncpa [#allocation9], 1
    %227 = vsyncpa [#allocation4], 1

</llo_original>
